<compile_context>
chip_gen: v5e
topology: v5e:2x2
jax: 0.10.0
libtpu: 0.0.40
codegen_flags: <defaults>
</compile_context>

<pallas_src>
import functools

import jax
import jax.numpy as jnp
from jax import lax
from jax.experimental import pallas as pl
from jax.experimental.pallas import tpu as pltpu


def _round_up(a, b):
    return (a + b - 1) // b * b


def _dict_fwd_kernel(x_ref, wct_ref, ws_ref, o_ref, *, n_valid):
    # x_ref  : (TB, Dp)  tile of flattened (zero-padded) inputs
    # wct_ref: (Dp, Np)  content dictionary, pre-transposed + zero-padded
    # ws_ref : (Np, Dp)  style dictionary, zero-padded
    # o_ref  : (TB, Dp)  output tile
    x = x_ref[...]
    wct = wct_ref[...]
    ws = ws_ref[...]

    # scores[b, n] = <x_b, wc_n>  -- MXU, f32 accumulation, native-dtype operands.
    scores = jnp.dot(x, wct, preferred_element_type=jnp.float32)        # (TB, Np)

    # Mask padded dictionary entries (static constant mask, cheap VPU select).
    if n_valid < scores.shape[-1]:
        col = lax.broadcasted_iota(jnp.int32, scores.shape, 1)
        scores = jnp.where(col < n_valid, scores, jnp.float32(-1e30))

    # Softmax over the dictionary axis (dim=1 in the PyTorch code), f32 math.
    m = jnp.max(scores, axis=-1, keepdims=True)
    e = jnp.exp(scores - m)
    denom = jnp.sum(e, axis=-1, keepdims=True)
    p = e * pl.reciprocal(denom, approx=True)                           # (TB, Np)

    # out[b, d] = sum_n p[b, n] * ws[n, d]  -- MXU, f32 accumulation.
    out = jnp.dot(p.astype(ws.dtype), ws, preferred_element_type=jnp.float32)
    o_ref[...] = out.astype(o_ref.dtype)


def dictionary_forward(x, weight_c, weight_s, *, tile_b=512):
    """Pallas implementation of Dictionary.forward (enabled=True, norm=False)."""
    N, D = weight_c.shape
    assert x.shape[-1] == D
    orig_shape = x.shape
    x_flat = x.reshape(-1, D)
    B = x_flat.shape[0]

    # Sublane-packing minimum on the batch axis: 8 for f32, 16 for bf16.
    sub = 16 if x.dtype == jnp.bfloat16 else 8
    tb = _round_up(min(tile_b, _round_up(B, sub)), sub)

    Bp = _round_up(B, tb)           # pad batch to a whole number of tiles
    Dp = _round_up(D, 128)          # lane-pad embedding dim
    Np = _round_up(N, 128)          # lane-pad dictionary size

    # One-time XLA-side layout plumbing: pad + pre-transpose weight_c.
    x_pad = jnp.pad(x_flat, ((0, Bp - B), (0, Dp - D)))
    wct_pad = jnp.pad(jnp.transpose(weight_c), ((0, Dp - D), (0, Np - N)))  # (Dp, Np)
    ws_pad = jnp.pad(weight_s, ((0, Np - N), (0, Dp - D)))                  # (Np, Dp)

    out_pad = pl.pallas_call(
        functools.partial(_dict_fwd_kernel, n_valid=N),
        out_shape=jax.ShapeDtypeStruct((Bp, Dp), x.dtype),
        grid_spec=pltpu.PrefetchScalarGridSpec(
            num_scalar_prefetch=0,
            grid=(Bp // tb,),
            in_specs=[
                pl.BlockSpec((tb, Dp), lambda i: (i, 0)),   # x tile
                pl.BlockSpec((Dp, Np), lambda i: (0, 0)),   # weight_c.T (resident)
                pl.BlockSpec((Np, Dp), lambda i: (0, 0)),   # weight_s   (resident)
            ],
            out_specs=pl.BlockSpec((tb, Dp), lambda i: (i, 0)),
        ),
        compiler_params=pltpu.CompilerParams(
            dimension_semantics=("parallel",)),
    )(x_pad, wct_pad, ws_pad)

    return out_pad[:B, :D].reshape(orig_shape)


def dictionary_forward_ref(x, weight_c, weight_s):
    """Pure-JAX reference for verification."""
    D = weight_c.shape[1]
    xf = x.reshape(-1, D).astype(jnp.float32)
    w = jax.nn.softmax(xf @ weight_c.T.astype(jnp.float32), axis=1)
    out = w @ weight_s.astype(jnp.float32)
    return out.reshape(x.shape).astype(x.dtype)


if __name__ == "__main__":
    # Small shapes consistent with the module: num_embeddings=64, embedding_dim=32,
    # x of shape (batch=2, seq=8, embedding_dim=32) -> flattened B=16.
    num_embeddings = 64
    embedding_dim = 32
    batch, seq = 2, 8

    key = jax.random.PRNGKey(0)
    k_x, k_ws, k_wc = jax.random.split(key, 3)

    # Deterministic parameter init mimicking util.truncated_normal_(mean=0, std=1).
    weight_s = jax.random.truncated_normal(
        k_ws, -2.0, 2.0, (num_embeddings, embedding_dim), dtype=jnp.float32)
    weight_c = jax.random.truncated_normal(
        k_wc, -2.0, 2.0, (num_embeddings, embedding_dim), dtype=jnp.float32)

    x = jax.random.normal(k_x, (batch, seq, embedding_dim), dtype=jnp.float32)

    out = dictionary_forward(x, weight_c, weight_s)
    out = jax.block_until_ready(out)

    ref = dictionary_forward_ref(x, weight_c, weight_s)
    assert out.shape == x.shape
    # Slightly loosened tolerance: approx EUP reciprocal in the softmax denom.
    assert jnp.allclose(out, ref, atol=2e-3, rtol=2e-3), "mismatch vs reference"

    print("KERNEL_OK")
</pallas_src>

<mosaic_0001>
module attributes {stable_mosaic.version = 11 : i64} {
  func.func @_dict_fwd_kernel(%arg0: i32, %arg1: memref<16x128xf32, #tpu.memory_space<vmem>>, %arg2: memref<128x128xf32, #tpu.memory_space<vmem>>, %arg3: memref<128x128xf32, #tpu.memory_space<vmem>>, %arg4: memref<16x128xf32, #tpu.memory_space<vmem>>) attributes {dimension_semantics = [#tpu.dimension_semantics<parallel>], iteration_bounds = array<i64: 1>, scalar_prefetch = 0 : i64, scratch_operands = 0 : i64, tpu.core_type = #tpu.core_type<tc>, window_params = [{transform_indices = @transform_0, window_bounds = array<i64: 16, 128>}, {pipeline_mode = #tpu.pipeline_mode<synchronous>, transform_indices = @transform_1, window_bounds = array<i64: 128, 128>}, {pipeline_mode = #tpu.pipeline_mode<synchronous>, transform_indices = @transform_2, window_bounds = array<i64: 128, 128>}, {transform_indices = @transform_3, window_bounds = array<i64: 16, 128>}]} {
    %c0 = arith.constant 0 : index
    %c0_0 = arith.constant 0 : index
    %0 = vector.load %arg1[%c0, %c0_0] : memref<16x128xf32, #tpu.memory_space<vmem>>, vector<16x128xf32>
    %c0_1 = arith.constant 0 : index
    %c0_2 = arith.constant 0 : index
    %1 = vector.load %arg2[%c0_1, %c0_2] : memref<128x128xf32, #tpu.memory_space<vmem>>, vector<128x128xf32>
    %c0_3 = arith.constant 0 : index
    %c0_4 = arith.constant 0 : index
    %2 = vector.load %arg3[%c0_3, %c0_4] : memref<128x128xf32, #tpu.memory_space<vmem>>, vector<128x128xf32>
    %cst = arith.constant dense<0.000000e+00> : vector<16x128xf32>
    %3 = tpu.matmul %0, %1, %cst {dimension_numbers = #tpu.dot_dimension_numbers<[1], [0], [0], [1], [0, 0, 1, 1], [], []>} : vector<16x128xf32>, vector<128x128xf32>, vector<16x128xf32> -> vector<16x128xf32>
    %4 = tpu.iota {dimensions = array<i32: 1>} : vector<16x128xi32>
    %c64_i32 = arith.constant 64 : i32
    %5 = vector.broadcast %c64_i32 : i32 to vector<16x128xi32>
    %6 = arith.cmpi slt, %4, %5 : vector<16x128xi32>
    %cst_5 = arith.constant -1.000000e+30 : f32
    %7 = vector.broadcast %cst_5 : f32 to vector<16x128xf32>
    %8 = arith.select %6, %3, %7 : vector<16x128xi1>, vector<16x128xf32>
    %cst_6 = arith.constant dense<0xFF800000> : vector<16xf32>
    %9 = vector.multi_reduction <maximumf>, %8, %cst_6 [1] : vector<16x128xf32> to vector<16xf32>
    %10 = vector.shape_cast %9 : vector<16xf32> to vector<16x1xf32>
    %11 = vector.broadcast %10 : vector<16x1xf32> to vector<16x128xf32>
    %12 = arith.subf %8, %11 : vector<16x128xf32>
    %13 = math.exp %12 : vector<16x128xf32>
    %cst_7 = arith.constant dense<0.000000e+00> : vector<16xf32>
    %14 = vector.multi_reduction <add>, %13, %cst_7 [1] : vector<16x128xf32> to vector<16xf32>
    %15 = vector.shape_cast %14 : vector<16xf32> to vector<16x1xf32>
    %16 = tpu.reciprocal %15 {approx = true} : vector<16x1xf32> -> vector<16x1xf32>
    %17 = vector.broadcast %16 : vector<16x1xf32> to vector<16x128xf32>
    %18 = arith.mulf %13, %17 : vector<16x128xf32>
    %cst_8 = arith.constant dense<0.000000e+00> : vector<16x128xf32>
    %19 = tpu.matmul %18, %2, %cst_8 {dimension_numbers = #tpu.dot_dimension_numbers<[1], [0], [0], [1], [0, 0, 1, 1], [], []>} : vector<16x128xf32>, vector<128x128xf32>, vector<16x128xf32> -> vector<16x128xf32>
    %c0_9 = arith.constant 0 : index
    %c0_10 = arith.constant 0 : index
    %20 = vector.load %arg4[%c0_9, %c0_10] : memref<16x128xf32, #tpu.memory_space<vmem>>, vector<16x128xf32>
    tpu.vector_store %arg4[%c0_9, %c0_10], %19 {strides = array<i32>} : memref<16x128xf32, #tpu.memory_space<vmem>>, vector<16x128xf32>,
    return
  }
  func.func @transform_0(%arg0: i32) -> (i32, i32) {
    %c0_i32 = arith.constant 0 : i32
    %c0_i32_0 = arith.constant 0 : i32
    return %arg0, %c0_i32 : i32, i32
  }
  func.func @transform_1(%arg0: i32) -> (i32, i32) {
    %c0_i32 = arith.constant 0 : i32
    %c0_i32_0 = arith.constant 0 : i32
    %c0_i32_1 = arith.constant 0 : i32
    return %c0_i32, %c0_i32_0 : i32, i32
  }
  func.func @transform_2(%arg0: i32) -> (i32, i32) {
    %c0_i32 = arith.constant 0 : i32
    %c0_i32_0 = arith.constant 0 : i32
    %c0_i32_1 = arith.constant 0 : i32
    return %c0_i32, %c0_i32_0 : i32, i32
  }
  func.func @transform_3(%arg0: i32) -> (i32, i32) {
    %c0_i32 = arith.constant 0 : i32
    %c0_i32_0 = arith.constant 0 : i32
    return %arg0, %c0_i32 : i32, i32
  }
}

</mosaic_0001>

<llo_original>
// kernel: tpu_custom_call.1
$region0: #{tpu_custom_call.1}
  #allocation0 [shape = 'u32[]', space=smem, size = 0x4, offset = 0x4, fixed_abs, tag = 'smem constant byte address 0x4 - core index']
  #allocation1 [shape = 'u32[72,128]{1,0:T(1,128)}', space=vmem, size = 0x9000, scoped, tag = 'internal scratch']
  %s0 = inlined_call_operand.hbm [shape: f32[16,128], index: 0, kind: input, shape index: {}]
  %s1 = inlined_call_operand.hbm [shape: f32[128,128], index: 1, kind: input, shape index: {}]
  %s2 = inlined_call_operand.hbm [shape: f32[128,128], index: 2, kind: input, shape index: {}]
  %s3 = inlined_call_operand.hbm [shape: f32[16,128], index: 3, kind: output, shape index: {}]
  %s4 = sld [smem:[#allocation0]]
  $region34: #{tpu_custom_call.1} parent=0
    _
  %s6 = ssub.s32 1, %s4
  %s7 = scalar_select 0, %s6, %s4
  $region1: #{tpu_custom_call.1} parent=0
    #allocation2 [shape = 'u8[8192]{0}', space=vmem, size = 0x2000, scoped, tag = 'input window, operand 0, single buffered']
    #allocation3 [shape = 's32[1]{0}', space=sflag, size = 0x4, scoped, tag = 'scoped memory for tpu_custom_call.1']
    #allocation4 [shape = 's32[1]{0}', space=sflag, size = 0x4, scoped, tag = 'scoped memory for tpu_custom_call.1']
    #allocation5 [shape = 'u8[65536]{0}', space=vmem, size = 0x10000, scoped, tag = 'input window, operand 1, single buffered']
    #allocation6 [shape = 's32[1]{0}', space=sflag, size = 0x4, scoped, tag = 'scoped memory for tpu_custom_call.1']
    #allocation7 [shape = 'u8[65536]{0}', space=vmem, size = 0x10000, scoped, tag = 'input window, operand 2, single buffered']
    #allocation8 [shape = 'u8[8192]{0}', space=vmem, size = 0x2000, scoped, tag = 'output window, operand 0, single buffered']
    %8 = vsyncpa [#allocation3], 0
    %9 = vsyncpa [#allocation6], 0
    %10 = vsyncpa [#allocation4], 0
    // Predicated region
    $region2: #{tpu_custom_call.1} parent=1 // pred_check
      _
    $region3: #{tpu_custom_call.1} parent=1 // pred_check_branch
      %12 = sbr.rel (0) target = $region5
    $region4: #{tpu_custom_call.1} parent=1 // pred_region
      %14 = vsyncadd [#allocation3], 0
      %s15 = sshll.u32 %s0, 4
      %s16 = int_to_ptr.hbm [resolvable:$true] %s15
      %s17 = sshll.u32 [#allocation2], 4
      %s18 = int_to_ptr.vmem [resolvable:$true] %s17
      %23 = dma.hbm_to_vmem [thread:$0]  %s16, 256, %s18, [#allocation3], 128, 128, 8
    $region5: #{tpu_custom_call.1} parent=1 // pred_fallthru
      _
    // Predicated region
    $region6: #{tpu_custom_call.1} parent=1 // pred_check
      _
    $region7: #{tpu_custom_call.1} parent=1 // pred_check_branch
      %25 = sbr.rel (0) target = $region9
    $region8: #{tpu_custom_call.1} parent=1 // pred_region
      %27 = vsyncadd [#allocation6], 0
      %s28 = sshll.u32 %s1, 4
      %s29 = int_to_ptr.hbm [resolvable:$true] %s28
      %s30 = sshll.u32 [#allocation5], 4
      %s31 = int_to_ptr.vmem [resolvable:$true] %s30
      %36 = dma.hbm_to_vmem [thread:$0]  %s29, 2048, %s31, [#allocation6], 128, 128, 8
    $region9: #{tpu_custom_call.1} parent=1 // pred_fallthru
      _
    // Predicated region
    $region10: #{tpu_custom_call.1} parent=1 // pred_check
      _
    $region11: #{tpu_custom_call.1} parent=1 // pred_check_branch
      %38 = sbr.rel (0) target = $region13
    $region12: #{tpu_custom_call.1} parent=1 // pred_region
      %40 = vsyncadd [#allocation6], 0
      %s41 = sshll.u32 %s2, 4
      %s42 = int_to_ptr.hbm [resolvable:$true] %s41
      %s43 = sshll.u32 [#allocation7], 4
      %s44 = int_to_ptr.vmem [resolvable:$true] %s43
      %49 = dma.hbm_to_vmem [thread:$0]  %s42, 2048, %s44, [#allocation6], 128, 128, 8
    $region13: #{tpu_custom_call.1} parent=1 // pred_fallthru
      _
    // Predicated region
    $region14: #{tpu_custom_call.1} parent=1 // pred_check
      _
    $region15: #{tpu_custom_call.1} parent=1 // pred_check_branch
      %51 = sbr.rel (0) target = $region17
    $region16: #{tpu_custom_call.1} parent=1 // pred_region
      %53 = dma.done [#allocation3], 256
    $region17: #{tpu_custom_call.1} parent=1 // pred_fallthru
      _
    // Predicated region
    $region18: #{tpu_custom_call.1} parent=1 // pred_check
      _
    $region19: #{tpu_custom_call.1} parent=1 // pred_check_branch
      %55 = sbr.rel (0) target = $region21
    $region20: #{tpu_custom_call.1} parent=1 // pred_region
      %57 = dma.done [#allocation6], 2048
    $region21: #{tpu_custom_call.1} parent=1 // pred_fallthru
      _
    // Predicated region
    $region22: #{tpu_custom_call.1} parent=1 // pred_check
      _
    $region23: #{tpu_custom_call.1} parent=1 // pred_check_branch
      %59 = sbr.rel (0) target = $region25
    $region24: #{tpu_custom_call.1} parent=1 // pred_region
      %61 = dma.done [#allocation6], 2048
    $region25: #{tpu_custom_call.1} parent=1 // pred_fallthru
      _
    %v62 = vld [vmem:[#allocation2] sm:$0xff]
    %v63 = vld [vmem:[#allocation2 + $0x8] sm:$0xff]
    %v64 = vld [vmem:[#allocation5] sm:$0xff]
    %v65 = vld [vmem:[#allocation5 + $0x8] sm:$0xff]
    %v66 = vld [vmem:[#allocation5 + $0x10] sm:$0xff]
    %v67 = vld [vmem:[#allocation5 + $0x18] sm:$0xff]
    %v68 = vld [vmem:[#allocation5 + $0x20] sm:$0xff]
    %v69 = vld [vmem:[#allocation5 + $0x28] sm:$0xff]
    %v70 = vld [vmem:[#allocation5 + $0x30] sm:$0xff]
    %v71 = vld [vmem:[#allocation5 + $0x38] sm:$0xff]
    %v72 = vld [vmem:[#allocation5 + $0x40] sm:$0xff]
    %v73 = vld [vmem:[#allocation5 + $0x48] sm:$0xff]
    %v74 = vld [vmem:[#allocation5 + $0x50] sm:$0xff]
    %v75 = vld [vmem:[#allocation5 + $0x58] sm:$0xff]
    %v76 = vld [vmem:[#allocation5 + $0x60] sm:$0xff]
    %v77 = vld [vmem:[#allocation5 + $0x68] sm:$0xff]
    %v78 = vld [vmem:[#allocation5 + $0x70] sm:$0xff]
    %v79 = vld [vmem:[#allocation5 + $0x78] sm:$0xff]
    %v80 = vld [vmem:[#allocation7] sm:$0xff]
    %v81 = vld [vmem:[#allocation7 + $0x8] sm:$0xff]
    %v82 = vld [vmem:[#allocation7 + $0x10] sm:$0xff]
    %v83 = vld [vmem:[#allocation7 + $0x18] sm:$0xff]
    %v84 = vld [vmem:[#allocation7 + $0x20] sm:$0xff]
    %v85 = vld [vmem:[#allocation7 + $0x28] sm:$0xff]
    %v86 = vld [vmem:[#allocation7 + $0x30] sm:$0xff]
    %v87 = vld [vmem:[#allocation7 + $0x38] sm:$0xff]
    %v88 = vld [vmem:[#allocation7 + $0x40] sm:$0xff]
    %v89 = vld [vmem:[#allocation7 + $0x48] sm:$0xff]
    %v90 = vld [vmem:[#allocation7 + $0x50] sm:$0xff]
    %v91 = vld [vmem:[#allocation7 + $0x58] sm:$0xff]
    %v92 = vld [vmem:[#allocation7 + $0x60] sm:$0xff]
    %v93 = vld [vmem:[#allocation7 + $0x68] sm:$0xff]
    %v94 = vld [vmem:[#allocation7 + $0x70] sm:$0xff]
    %v95 = vld [vmem:[#allocation7 + $0x78] sm:$0xff]
    %96 = vmatpush.msra.mxu0 %v79
    %97 = vmatpush.msra.mxu0 %v78
    %98 = vmatpush.msra.mxu0 %v77
    %99 = vmatpush.msra.mxu0 %v76
    %100 = vmatpush.msra.mxu0 %v75
    %101 = vmatpush.msra.mxu0 %v74
    %102 = vmatpush.msra.mxu0 %v73
    %103 = vmatpush.msra.mxu0 %v72
    %104 = vmatpush.msra.mxu0 %v71
    %105 = vmatpush.msra.mxu0 %v70
    %106 = vmatpush.msra.mxu0 %v69
    %107 = vmatpush.msra.mxu0 %v68
    %108 = vmatpush.msra.mxu0 %v67
    %109 = vmatpush.msra.mxu0 %v66
    %110 = vmatpush.msra.mxu0 %v65
    %111 = vmatpush.msra.mxu0 %v64
    %112 = vmatmul.f32.gmra.mxu0 %v62
    %v113 = vpop.f32.mrf.mxu0
    %v114 = vadd.f32 0.0, %v113
    %115 = vmatmul.f32.gmra.mxu0 %v63
    %v116 = vpop.f32.mrf.mxu0
    %v117 = vadd.f32 0.0, %v116
    %118 = vdwg.mxu0
    %v119 = vlaneseq
    %v120 = vand.u32 %v119, 127
    %vm121 = vcmp.lt.s32.totalorder %v120, 64
    %v122 = vsel %vm121, %v114, -1e+30
    %v123 = vsel %vm121, %v117, -1e+30
    %124 = vmax.xlane.f32.xlu0 %v122
    %v125 = vpop.xlane.xlu0 %124
    %126 = vmax.xlane.f32.xlu0 %v123
    %v127 = vpop.xlane.xlu0 %126
    %v128 = vsub.f32 %v122, %v125
    %v129 = vsub.f32 %v123, %v127
    %v130 = vmul.f32 %v128, 1.442695
    %v131 = vpow.pop %v130
    %v132 = vmul.f32 %v129, 1.442695
    %v133 = vpow.pop %v132
    %134 = vadd.xlane.f32.xlu0 %v131
    %v135 = vpop.xlane.xlu0 %134
    %136 = vadd.xlane.f32.xlu0 %v133
    %v137 = vpop.xlane.xlu0 %136
    %v138 = vrcp.pop %v135
    %v139 = vrcp.pop %v137
    %v140 = vmul.f32 %v131, %v138
    %v141 = vmul.f32 %v133, %v139
    %142 = vmatpush.msra.mxu0 %v95
    %143 = vmatpush.msra.mxu0 %v94
    %144 = vmatpush.msra.mxu0 %v93
    %145 = vmatpush.msra.mxu0 %v92
    %146 = vmatpush.msra.mxu0 %v91
    %147 = vmatpush.msra.mxu0 %v90
    %148 = vmatpush.msra.mxu0 %v89
    %149 = vmatpush.msra.mxu0 %v88
    %150 = vmatpush.msra.mxu0 %v87
    %151 = vmatpush.msra.mxu0 %v86
    %152 = vmatpush.msra.mxu0 %v85
    %153 = vmatpush.msra.mxu0 %v84
    %154 = vmatpush.msra.mxu0 %v83
    %155 = vmatpush.msra.mxu0 %v82
    %156 = vmatpush.msra.mxu0 %v81
    %157 = vmatpush.msra.mxu0 %v80
    %158 = vmatmul.f32.gmra.mxu0 %v140
    %v159 = vpop.f32.mrf.mxu0
    %v160 = vadd.f32 0.0, %v159
    %161 = vmatmul.f32.gmra.mxu0 %v141
    %v162 = vpop.f32.mrf.mxu0
    %v163 = vadd.f32 0.0, %v162
    %164 = vdwg.mxu0
    %165 = vst [vmem:[#allocation8] sm:$0xff] %v160
    %166 = vst [vmem:[#allocation8 + $0x8] sm:$0xff] %v163
    // Predicated region
    $region26: #{tpu_custom_call.1} parent=1 // pred_check
      _
    $region27: #{tpu_custom_call.1} parent=1 // pred_check_branch
      %168 = sbr.rel (0) target = $region29
    $region28: #{tpu_custom_call.1} parent=1 // pred_region
      %170 = vsyncadd [#allocation4], 0
      %s171 = sshll.u32 [#allocation8], 4
      %s172 = int_to_ptr.vmem [resolvable:$true] %s171
      %s173 = sshll.u32 %s3, 4
      %s174 = int_to_ptr.hbm [resolvable:$true] %s173
      %179 = dma.vmem_to_hbm [thread:$0]  %s172, 256, %s174, [#allocation4], 128, 128, 8
    $region29: #{tpu_custom_call.1} parent=1 // pred_fallthru
      _
    // Predicated region
    $region30: #{tpu_custom_call.1} parent=1 // pred_check
      _
    $region31: #{tpu_custom_call.1} parent=1 // pred_check_branch
      %181 = sbr.rel (0) target = $region33
    $region32: #{tpu_custom_call.1} parent=1 // pred_region
      %183 = dma.done [#allocation4], 256
    $region33: #{tpu_custom_call.1} parent=1 // pred_fallthru
      _
    %184 = vsyncpa [#allocation3], 1
    %185 = vsyncpa [#allocation6], 1
    %186 = vsyncpa [#allocation4], 1

</llo_original>
